<compile_context>
chip_gen: v5e
topology: v5e:2x2
jax: 0.10.0
libtpu: 0.0.40
codegen_flags: <defaults>
</compile_context>

<pallas_src>
import jax
import jax.numpy as jnp
from jax import lax
from jax.experimental import pallas as pl
from jax.experimental.pallas import tpu as pltpu

LANES = 128
SUBLANES = 8
ROW_CHUNK = SUBLANES * LANES          # 1024: bulk length is a multiple of this
SMALL_N_THRESHOLD = 1 << 20           # below this, plain JAX beats the custom call


def _device_config():
    """(ncores, tm_max) tuned per TPU generation; conservative fallback."""
    try:
        kind = jax.devices()[0].device_kind.lower()
    except Exception:  # pragma: no cover - non-TPU / exotic backends
        kind = ""
    if "v7" in kind:
        # 2 TensorCores; 8192*128*4B = 4 MiB/block/input -> 16 MiB double-buffered
        # per TC, well under the 32 MiB scoped default (64 MiB physical per TC).
        return 2, 8192
    if "v6" in kind:
        # Single TC, 32 MiB scoped default -> 16 MiB double-buffered is fine.
        return 1, 8192
    # v5e (16 MiB scoped default) or unknown: 4096 rows -> 8 MiB double-buffered.
    return 1, 4096


def _make_kernel(tm, bpc, rows, num_full_blocks, needs_mask):
    """Accumulate sum((p-t)^2) of (tm, LANES) blocks into the resident (8, LANES) output."""

    def kernel(p_ref, t_ref, o_ref):
        j = pl.program_id(1)

        @pl.when(j == 0)
        def _init():
            o_ref[...] = jnp.zeros_like(o_ref)

        # Cast before subtracting (exact for f32; better accuracy for bf16 inputs).
        p = p_ref[...].astype(jnp.float32)
        t = t_ref[...].astype(jnp.float32)
        d = p - t
        dd = d * d

        if not needs_mask:
            # Mask-free hot path: fold rows into the (8, LANES) accumulator.
            # Reduction over the leading (untiled) axis is pure VPU adds.
            o_ref[...] += jnp.sum(
                dd.reshape(tm // SUBLANES, SUBLANES, LANES), axis=0)
        else:
            c = pl.program_id(0)
            blk = c * bpc + j
            is_full = blk < num_full_blocks

            @pl.when(is_full)
            def _full_block():
                # Interior blocks stay mask-free even when the grid is ragged.
                o_ref[...] += jnp.sum(
                    dd.reshape(tm // SUBLANES, SUBLANES, LANES), axis=0)

            @pl.when(jnp.logical_not(is_full))
            def _ragged_block():
                # Partial last block and clamped duplicate blocks: zero the rows
                # beyond the true row count.  Duplicate blocks (blk >= #blocks)
                # have row0 >= rows, so they contribute exactly 0.
                row0 = blk * tm
                ridx = row0 + lax.broadcasted_iota(jnp.int32, (tm, LANES), 0)
                ddm = jnp.where(ridx < rows, dd, 0.0)
                o_ref[...] += jnp.sum(
                    ddm.reshape(tm // SUBLANES, SUBLANES, LANES), axis=0)

    return kernel


def my_loss(pred, truth, use_kernel=None, tm_max=None):
    """sum((pred - truth)**2), matching torch.sum((pred - truth) ** 2)."""
    assert pred.shape == truth.shape
    out_dtype = pred.dtype

    p = pred.reshape(-1)
    t = truth.reshape(-1)
    n = p.shape[0]

    if use_kernel is None:
        # Small-input fast path: custom-call / grid setup dominates below ~1M
        # elements, where a single fused XLA reduction already hits roofline.
        use_kernel = n >= SMALL_N_THRESHOLD

    # Bulk = largest multiple of 8*128 (no padding copies; when n is already
    # aligned the reshape is free).  Tail (<1024 elems) done in plain JAX.
    n_bulk = (n // ROW_CHUNK) * ROW_CHUNK if use_kernel else 0

    total = jnp.float32(0.0)

    if n_bulk:
        ncores_cfg, default_tm = _device_config()
        tm_cap = default_tm if tm_max is None else tm_max
        assert tm_cap % SUBLANES == 0

        pb = p if n_bulk == n else p[:n_bulk]
        tb = t if n_bulk == n else t[:n_bulk]
        rows = n_bulk // LANES                       # multiple of 8
        tm = min(tm_cap, rows)                       # multiple of 8 (or == rows)
        num_blocks = (rows + tm - 1) // tm
        num_full_blocks = rows // tm                 # blocks with no ragged rows
        ncores = min(ncores_cfg, num_blocks)
        bpc = (num_blocks + ncores - 1) // ncores    # blocks per core
        needs_mask = (num_full_blocks != num_blocks) or (ncores * bpc != num_blocks)

        p2 = pb.reshape(rows, LANES)
        t2 = tb.reshape(rows, LANES)

        if ncores * bpc == num_blocks:
            def in_map(c, j):
                return (c * bpc + j, 0)
        else:
            def in_map(c, j):
                # Clamp so the DMA never points past the array; clamped duplicate
                # blocks contribute 0 via the in-kernel row mask.
                return (jnp.minimum(c * bpc + j, num_blocks - 1), 0)

        partials = pl.pallas_call(
            _make_kernel(tm, bpc, rows, num_full_blocks, needs_mask),
            out_shape=jax.ShapeDtypeStruct((ncores * SUBLANES, LANES), jnp.float32),
            grid_spec=pltpu.PrefetchScalarGridSpec(
                num_scalar_prefetch=0,
                grid=(ncores, bpc),
                in_specs=[
                    pl.BlockSpec((tm, LANES), in_map),
                    pl.BlockSpec((tm, LANES), in_map),
                ],
                # Block index constant over j -> output stays VMEM-resident
                # across the reduction sweep; single write-back per core.
                out_specs=pl.BlockSpec((SUBLANES, LANES), lambda c, j: (c, 0)),
            ),
            compiler_params=pltpu.CompilerParams(
                dimension_semantics=("parallel", "arbitrary"),
            ),
            cost_estimate=pl.CostEstimate(
                flops=3 * n_bulk, transcendentals=0, bytes_accessed=8 * n_bulk),
        )(p2, t2)

        total = total + jnp.sum(partials)

    if n_bulk < n:
        pt = p[n_bulk:].astype(jnp.float32)
        tt = t[n_bulk:].astype(jnp.float32)
        dtail = pt - tt
        total = total + jnp.sum(dtail * dtail)

    return total.astype(out_dtype)


if __name__ == "__main__":
    key = jax.random.PRNGKey(0)
    k1, k2, k3, k4 = jax.random.split(key, 4)

    # 1) Small shape from the module spec: takes the plain-JAX fast path
    #    (kernel setup cost would dominate at 2048 elements).
    pred_s = jax.random.normal(k1, (2, 4, 16, 16), dtype=jnp.float32)
    truth_s = jax.random.normal(k2, (2, 4, 16, 16), dtype=jnp.float32)
    loss_s = jax.block_until_ready(my_loss(pred_s, truth_s))
    ref_s = jnp.sum((pred_s - truth_s) ** 2)
    assert jnp.allclose(loss_s, ref_s, rtol=1e-5, atol=1e-5), (loss_s, ref_s)

    # 2) Force the Pallas path on a modest NCHW input with a small test tile so
    #    the multi-block sweep, ragged last block, clamped duplicate block (on
    #    2-TC chips) and the <1024-element tail are all exercised.
    pred_m = jax.random.normal(k3, (2, 4, 96, 101), dtype=jnp.float32)
    truth_m = jax.random.normal(k4, (2, 4, 96, 101), dtype=jnp.float32)
    loss_m = jax.block_until_ready(my_loss(pred_m, truth_m, use_kernel=True, tm_max=256))
    ref_m = jnp.sum((pred_m - truth_m) ** 2)
    assert jnp.allclose(loss_m, ref_m, rtol=1e-5, atol=1e-5), (loss_m, ref_m)

    # 3) Also run once with the production (auto-tuned) tile size.
    loss_p = jax.block_until_ready(my_loss(pred_m, truth_m, use_kernel=True))
    assert jnp.allclose(loss_p, ref_m, rtol=1e-5, atol=1e-5), (loss_p, ref_m)

    print("KERNEL_OK")
</pallas_src>

<mosaic_0001>
module attributes {stable_mosaic.version = 11 : i64} {
  func.func @kernel(%arg0: i32, %arg1: i32, %arg2: memref<256x128xf32, #tpu.memory_space<vmem>>, %arg3: memref<256x128xf32, #tpu.memory_space<vmem>>, %arg4: memref<8x128xf32, #tpu.memory_space<vmem>>) attributes {dimension_semantics = [#tpu.dimension_semantics<parallel>, #tpu.dimension_semantics<arbitrary>], iteration_bounds = array<i64: 1, 3>, scalar_prefetch = 0 : i64, scratch_operands = 0 : i64, tpu.core_type = #tpu.core_type<tc>, window_params = [{transform_indices = @transform_0, window_bounds = array<i64: 256, 128>}, {transform_indices = @transform_1, window_bounds = array<i64: 256, 128>}, {transform_indices = @transform_2, window_bounds = array<i64: 8, 128>}]} {
    %c0_i32 = arith.constant 0 : i32
    %0 = arith.cmpi eq, %arg1, %c0_i32 : i32
    %1 = arith.extui %0 : i1 to i32
    %c0_i32_0 = arith.constant 0 : i32
    %2 = arith.cmpi ne, %1, %c0_i32_0 : i32
    scf.if %2 {
      %cst = arith.constant 0.000000e+00 : f32
      %15 = vector.broadcast %cst : f32 to vector<8x128xf32>
      %c0_6 = arith.constant 0 : index
      %c0_7 = arith.constant 0 : index
      %16 = vector.load %arg4[%c0_6, %c0_7] : memref<8x128xf32, #tpu.memory_space<vmem>>, vector<8x128xf32>
      tpu.vector_store %arg4[%c0_6, %c0_7], %15 {strides = array<i32>} : memref<8x128xf32, #tpu.memory_space<vmem>>, vector<8x128xf32>,
    } else {
    }
    %c0 = arith.constant 0 : index
    %c0_1 = arith.constant 0 : index
    %3 = vector.load %arg2[%c0, %c0_1] : memref<256x128xf32, #tpu.memory_space<vmem>>, vector<256x128xf32>
    %c0_2 = arith.constant 0 : index
    %c0_3 = arith.constant 0 : index
    %4 = vector.load %arg3[%c0_2, %c0_3] : memref<256x128xf32, #tpu.memory_space<vmem>>, vector<256x128xf32>
    %5 = arith.subf %3, %4 : vector<256x128xf32>
    %6 = arith.mulf %5, %5 : vector<256x128xf32>
    %c3_i32 = arith.constant 3 : i32
    %7 = arith.muli %arg0, %c3_i32 : i32
    %8 = arith.addi %7, %arg1 : i32
    %c2_i32 = arith.constant 2 : i32
    %9 = arith.cmpi slt, %8, %c2_i32 : i32
    %10 = arith.extui %9 : i1 to i32
    %c0_i32_4 = arith.constant 0 : i32
    %11 = arith.cmpi ne, %10, %c0_i32_4 : i32
    scf.if %11 {
      %c0_6 = arith.constant 0 : index
      %c0_7 = arith.constant 0 : index
      %15 = vector.load %arg4[%c0_6, %c0_7] : memref<8x128xf32, #tpu.memory_space<vmem>>, vector<8x128xf32>
      %16 = vector.shape_cast %6 : vector<256x128xf32> to vector<32x8x128xf32>
      %cst = arith.constant dense<0.000000e+00> : vector<8x128xf32>
      %17 = vector.multi_reduction <add>, %16, %cst [0] : vector<32x8x128xf32> to vector<8x128xf32>
      %18 = arith.addf %15, %17 : vector<8x128xf32>
      %c0_8 = arith.constant 0 : index
      %c0_9 = arith.constant 0 : index
      %19 = vector.load %arg4[%c0_8, %c0_9] : memref<8x128xf32, #tpu.memory_space<vmem>>, vector<8x128xf32>
      tpu.vector_store %arg4[%c0_8, %c0_9], %18 {strides = array<i32>} : memref<8x128xf32, #tpu.memory_space<vmem>>, vector<8x128xf32>,
    } else {
    }
    %true = arith.constant true
    %12 = arith.xori %9, %true : i1
    %13 = arith.extui %12 : i1 to i32
    %c0_i32_5 = arith.constant 0 : i32
    %14 = arith.cmpi ne, %13, %c0_i32_5 : i32
    scf.if %14 {
      %c256_i32 = arith.constant 256 : i32
      %15 = arith.muli %8, %c256_i32 : i32
      %16 = tpu.iota {dimensions = array<i32: 0>} : vector<256x128xi32>
      %17 = vector.broadcast %15 : i32 to vector<256x128xi32>
      %18 = arith.addi %17, %16 : vector<256x128xi32>
      %c600_i32 = arith.constant 600 : i32
      %19 = vector.broadcast %c600_i32 : i32 to vector<256x128xi32>
      %20 = arith.cmpi slt, %18, %19 : vector<256x128xi32>
      %cst = arith.constant 0.000000e+00 : f32
      %21 = vector.broadcast %cst : f32 to vector<256x128xf32>
      %22 = arith.select %20, %6, %21 : vector<256x128xi1>, vector<256x128xf32>
      %c0_6 = arith.constant 0 : index
      %c0_7 = arith.constant 0 : index
      %23 = vector.load %arg4[%c0_6, %c0_7] : memref<8x128xf32, #tpu.memory_space<vmem>>, vector<8x128xf32>
      %24 = vector.shape_cast %22 : vector<256x128xf32> to vector<32x8x128xf32>
      %cst_8 = arith.constant dense<0.000000e+00> : vector<8x128xf32>
      %25 = vector.multi_reduction <add>, %24, %cst_8 [0] : vector<32x8x128xf32> to vector<8x128xf32>
      %26 = arith.addf %23, %25 : vector<8x128xf32>
      %c0_9 = arith.constant 0 : index
      %c0_10 = arith.constant 0 : index
      %27 = vector.load %arg4[%c0_9, %c0_10] : memref<8x128xf32, #tpu.memory_space<vmem>>, vector<8x128xf32>
      tpu.vector_store %arg4[%c0_9, %c0_10], %26 {strides = array<i32>} : memref<8x128xf32, #tpu.memory_space<vmem>>, vector<8x128xf32>,
    } else {
    }
    return
  }
  func.func @transform_0(%arg0: i32, %arg1: i32) -> (i32, i32) {
    %c3_i32 = arith.constant 3 : i32
    %0 = arith.muli %arg0, %c3_i32 : i32
    %1 = arith.addi %0, %arg1 : i32
    %c0_i32 = arith.constant 0 : i32
    %c0_i32_0 = arith.constant 0 : i32
    return %1, %c0_i32 : i32, i32
  }
  func.func @transform_1(%arg0: i32, %arg1: i32) -> (i32, i32) {
    %c3_i32 = arith.constant 3 : i32
    %0 = arith.muli %arg0, %c3_i32 : i32
    %1 = arith.addi %0, %arg1 : i32
    %c0_i32 = arith.constant 0 : i32
    %c0_i32_0 = arith.constant 0 : i32
    return %1, %c0_i32 : i32, i32
  }
  func.func @transform_2(%arg0: i32, %arg1: i32) -> (i32, i32) {
    %c0_i32 = arith.constant 0 : i32
    %c0_i32_0 = arith.constant 0 : i32
    return %arg0, %c0_i32 : i32, i32
  }
}

</mosaic_0001>

<llo_original>
// kernel: tpu_custom_call.1
$region0: #{tpu_custom_call.1}
  #allocation0 [shape = 'u32[]', space=smem, size = 0x4, offset = 0x4, fixed_abs, tag = 'smem constant byte address 0x4 - core index']
  #allocation1 [shape = 'u32[72,128]{1,0:T(1,128)}', space=vmem, size = 0x9000, scoped, tag = 'internal scratch']
  %s0 = inlined_call_operand.hbm [shape: f32[600,128], index: 0, kind: input, shape index: {}]
  %s1 = inlined_call_operand.hbm [shape: f32[600,128], index: 1, kind: input, shape index: {}]
  %s2 = inlined_call_operand.hbm [shape: f32[8,128], index: 2, kind: output, shape index: {}]
  %s3 = sld [smem:[#allocation0]]
  $region61: #{tpu_custom_call.1} parent=0
    _
  %s5 = ssub.s32 1, %s3
  %s6 = scalar_select 0, %s5, %s3
  $region1: #{tpu_custom_call.1} parent=0
    #allocation2 [shape = 'u8[262144]{0}', space=vmem, size = 0x40000, scoped, tag = 'input window, operand 0']
    #allocation3 [shape = 's32[2]{0}', space=sflag, size = 0x8, scoped, tag = 'scoped memory for tpu_custom_call.1']
    #allocation4 [shape = 's32[2]{0}', space=sflag, size = 0x8, scoped, tag = 'scoped memory for tpu_custom_call.1']
    #allocation5 [shape = 'u8[262144]{0}', space=vmem, size = 0x40000, scoped, tag = 'input window, operand 1']
    #allocation6 [shape = 's32[2]{0}', space=sflag, size = 0x8, scoped, tag = 'scoped memory for tpu_custom_call.1']
    #allocation7 [shape = 'u8[4096]{0}', space=vmem, size = 0x1000, scoped, tag = 'output window, operand 0, single buffered']
    %7 = vsyncpa [#allocation3], 0
    %s8 = scalar_lea.sflag [#allocation3], 1
    %9 = vsyncpa %s8, 0
    %10 = vsyncpa [#allocation6], 0
    %s11 = scalar_lea.sflag [#allocation6], 1
    %12 = vsyncpa %s11, 0
    %13 = vsyncpa [#allocation4], 0
    loop: start=0, step=1, limit=5
    $region2: #{tpu_custom_call.1} parent=1 // loop_pre_header
      _
    $region3: #{tpu_custom_call.1} parent=1 // loop_header
      %s15 = sphi 0, %s19
      %p16 = scmp.ge.s32.totalorder %s15, 5
      %s22 = sphi 0, %s34
      %s23 = sphi 0, %s30
      %s24 = sphi 0, %s22
      %s25 = sphi 0, %s23
      %s26 = sphi 0, %s24
      %s27 = sphi 0, %s25
      %s41 = sphi 0, %s43
      %s44 = sphi 0, %s41
      %s45 = sphi 0, %s44
      %s61 = sphi 0, %s45
      %s71 = sphi 0, %s73
      %s74 = sphi 0, %s71
      %s75 = sphi 0, %s74
      %s91 = sphi 0, %s75
      %s97 = sphi 0, %s99
      %s100 = sphi 0, %s97
      %s101 = sphi 0, %s100
      %s117 = sphi 0, %s101
    $region4: #{tpu_custom_call.1} parent=1 // loop_header_branch
      %18 = sbr.rel (%p16) target = $region8
    $region5: #{tpu_custom_call.1} parent=1 // loop_body
      %s20 = ssub.s32 %s15, 1
      %s21 = ssub.s32 %s15, 2
      %s28 = sadd.s32 1, %s23
      %p29 = scmp.ge.s32.totalorder %s28, 3
      %s30 = scalar_select %p29, 0, %s28
      %s31 = sadd.s32 1, %s22
      %s32 = scalar_select %p29, %s31, %s22
      %p33 = scmp.ge.s32.totalorder %s32, 1
      %s34 = scalar_select %p33, 0, %s32
      %s35 = smul.u32 %s22, 3
      %s36 = sadd.s32 %s35, %s23
      %s37 = smul.u32 %s34, 3
      %s38 = sadd.s32 %s37, %s30
      %s39 = ssub.s32 %s36, %s38
      %p40 = scmp.eq.s32.totalorder %s39, 0
      %s42 = sadd.s32 %s41, 1
      %s43 = scalar_select %p40, %s41, %s42
      %p46 = pneg %p40
      %p47 = scmp.eq.s32.totalorder %s15, 2
      %p48 = por %p46, %p47
      %p49 = scmp.ne.s32.totalorder %s41, %s44
      %p50 = scmp.eq.s32.totalorder %s15, 0
      %p51 = por %p49, %p50
      %p52 = scmp.ne.s32.totalorder %s41, %s44
      %p53 = scmp.eq.s32.totalorder %s20, 2
      %p54 = por %p52, %p53
      %p55 = scmp.ne.s32.totalorder %s44, %s45
      %p56 = scmp.eq.s32.totalorder %s20, 0
      %p57 = por %p55, %p56
      %p58 = scmp.ne.s32.totalorder %s44, %s45
      %p59 = scmp.eq.s32.totalorder %s21, 2
      %p60 = por %p58, %p59
      %p62 = scmp.ne.s32.totalorder %s45, %s61
      %p63 = scmp.eq.s32.totalorder %s21, 0
      %p64 = por %p62, %p63
      %s65 = smul.u32 %s22, 3
      %s66 = sadd.s32 %s65, %s23
      %s67 = smul.u32 %s34, 3
      %s68 = sadd.s32 %s67, %s30
      %s69 = ssub.s32 %s66, %s68
      %p70 = scmp.eq.s32.totalorder %s69, 0
      %s72 = sadd.s32 %s71, 1
      %s73 = scalar_select %p70, %s71, %s72
      %p76 = pneg %p70
      %p77 = scmp.eq.s32.totalorder %s15, 2
      %p78 = por %p76, %p77
      %p79 = scmp.ne.s32.totalorder %s71, %s74
      %p80 = scmp.eq.s32.totalorder %s15, 0
      %p81 = por %p79, %p80
      %p82 = scmp.ne.s32.totalorder %s71, %s74
      %p83 = scmp.eq.s32.totalorder %s20, 2
      %p84 = por %p82, %p83
      %p85 = scmp.ne.s32.totalorder %s74, %s75
      %p86 = scmp.eq.s32.totalorder %s20, 0
      %p87 = por %p85, %p86
      %p88 = scmp.ne.s32.totalorder %s74, %s75
      %p89 = scmp.eq.s32.totalorder %s21, 2
      %p90 = por %p88, %p89
      %p92 = scmp.ne.s32.totalorder %s75, %s91
      %p93 = scmp.eq.s32.totalorder %s21, 0
      %p94 = por %p92, %p93
      %s95 = ssub.s32 %s22, %s34
      %p96 = scmp.eq.s32.totalorder %s95, 0
      %s98 = sadd.s32 %s97, 1
      %s99 = scalar_select %p96, %s97, %s98
      %p102 = pneg %p96
      %p103 = scmp.eq.s32.totalorder %s15, 2
      %p104 = por %p102, %p103
      %p105 = scmp.ne.s32.totalorder %s97, %s100
      %p106 = scmp.eq.s32.totalorder %s15, 0
      %p107 = por %p105, %p106
      %p108 = scmp.ne.s32.totalorder %s97, %s100
      %p109 = scmp.eq.s32.totalorder %s20, 2
      %p110 = por %p108, %p109
      %p111 = scmp.ne.s32.totalorder %s100, %s101
      %p112 = scmp.eq.s32.totalorder %s20, 0
      %p113 = por %p111, %p112
      %p114 = scmp.ne.s32.totalorder %s100, %s101
      %p115 = scmp.eq.s32.totalorder %s21, 2
      %p116 = por %p114, %p115
      %p118 = scmp.ne.s32.totalorder %s101, %s117
      %p119 = scmp.eq.s32.totalorder %s21, 0
      %p120 = por %p118, %p119
      %p121 = scmp.le.s32.totalorder 1, %s15
      %p122 = scmp.lt.s32.totalorder %s15, 4
      %p123 = pnand %p121, %p122
      %p124 = pneg %p123
      // Predicated region
      $region9: #{tpu_custom_call.1} parent=5 // pred_check
        _
      $region10: #{tpu_custom_call.1} parent=5 // pred_check_branch
        %126 = sbr.rel (%p123) target = $region12
      $region11: #{tpu_custom_call.1} parent=5 // pred_region
        %s127 = ssub.s32 %s15, 1
      $region12: #{tpu_custom_call.1} parent=5 // pred_fallthru
        _
      %p128 = scmp.lt.s32.totalorder %s15, 3
      // Predicated region
      $region13: #{tpu_custom_call.1} parent=5 // pred_check
        %p129 = pneg %p128
      $region14: #{tpu_custom_call.1} parent=5 // pred_check_branch
        %131 = sbr.rel (%p129) target = $region16
      $region15: #{tpu_custom_call.1} parent=5 // pred_region
        // Predicated region
        $region17: #{tpu_custom_call.1} parent=15 // pred_check
          %p132 = pneg %p51
        $region18: #{tpu_custom_call.1} parent=15 // pred_check_branch
          %134 = sbr.rel (%p132) target = $region20
        $region19: #{tpu_custom_call.1} parent=15 // pred_region
          %s135 = sand.u32 %s41, 1
          %s136 = scalar_lea.sflag [#allocation3], %s135
          %s137 = sand.u32 %s41, 1
          %s138 = smul.addr %s137, 256
          %s139 = scalar_lea.vmem [#allocation2], %s138
          %s140 = smul.u32 %s22, 3
          %s141 = sadd.s32 %s140, %s23
          %s142 = smul.u32 32, %s141
          %s143 = ssub.s32 75, %s142
          %p144 = scmp.lt.s32.totalorder %s143, 32
          %s145 = scalar_select %p144, %s143, 32
          %s146 = smul.u32 8, %s145
          %s147 = ssub.s32 256, %s146
          %s148 = sshll.u32 %s147, 4
          %149 = vsyncadd %s136, %s148
          %p150 = scmp.ne.s32.totalorder 0, %s146
          %s151 = smul.addr %s142, 8
          %s152 = scalar_lea.hbm %s0, %s151
          %s153 = smul.u32 8, %s145
          %s154 = sshll.u32 %s152, 4
          %s155 = int_to_ptr.hbm [resolvable:$true] %s154
          %s156 = sshll.u32 %s139, 4
          %s157 = int_to_ptr.vmem [resolvable:$true] %s156
          %s158 = sshll.u32 %s153, 4
          %162 = dma.hbm_to_vmem [thread:$0]  (%p150), %s155, %s158, %s157, %s136, 128, 128, 8
        $region20: #{tpu_custom_call.1} parent=15 // pred_fallthru
          _
        // Predicated region
        $region21: #{tpu_custom_call.1} parent=15 // pred_check
          %p163 = pneg %p81
        $region22: #{tpu_custom_call.1} parent=15 // pred_check_branch
          %165 = sbr.rel (%p163) target = $region24
        $region23: #{tpu_custom_call.1} parent=15 // pred_region
          %s166 = sand.u32 %s71, 1
          %s167 = scalar_lea.sflag [#allocation6], %s166
          %s168 = sand.u32 %s71, 1
          %s169 = smul.addr %s168, 256
          %s170 = scalar_lea.vmem [#allocation5], %s169
          %s171 = smul.u32 %s22, 3
          %s172 = sadd.s32 %s171, %s23
          %s173 = smul.u32 32, %s172
          %s174 = ssub.s32 75, %s173
          %p175 = scmp.lt.s32.totalorder %s174, 32
          %s176 = scalar_select %p175, %s174, 32
          %s177 = smul.u32 8, %s176
          %s178 = ssub.s32 256, %s177
          %s179 = sshll.u32 %s178, 4
          %180 = vsyncadd %s167, %s179
          %p181 = scmp.ne.s32.totalorder 0, %s177
          %s182 = smul.addr %s173, 8
          %s183 = scalar_lea.hbm %s1, %s182
          %s184 = smul.u32 8, %s176
          %s185 = sshll.u32 %s183, 4
          %s186 = int_to_ptr.hbm [resolvable:$true] %s185
          %s187 = sshll.u32 %s170, 4
          %s188 = int_to_ptr.vmem [resolvable:$true] %s187
          %s189 = sshll.u32 %s184, 4
          %193 = dma.hbm_to_vmem [thread:$0]  (%p181), %s186, %s189, %s188, %s167, 128, 128, 8
        $region24: #{tpu_custom_call.1} parent=15 // pred_fallthru
          _
      $region16: #{tpu_custom_call.1} parent=5 // pred_fallthru
        _
      %p194 = scmp.le.s32.totalorder 1, %s15
      %p195 = scmp.lt.s32.totalorder %s15, 4
      %p196 = pnand %p194, %p195
      %p197 = pneg %p196
      // Predicated region
      $region25: #{tpu_custom_call.1} parent=5 // pred_check
        _
      $region26: #{tpu_custom_call.1} parent=5 // pred_check_branch
        %199 = sbr.rel (%p196) target = $region28
      $region27: #{tpu_custom_call.1} parent=5 // pred_region
        %s200 = ssub.s32 %s15, 1
        %s201 = sand.u32 %s44, 1
        %s202 = scalar_lea.sflag [#allocation3], %s201
        %s203 = sand.u32 %s44, 1
        %s204 = smul.addr %s203, 256
        %s205 = scalar_lea.vmem [#allocation2], %s204
        // Predicated region
        $region29: #{tpu_custom_call.1} parent=27 // pred_check
          %p206 = pneg %p57
        $region30: #{tpu_custom_call.1} parent=27 // pred_check_branch
          %208 = sbr.rel (%p206) target = $region32
        $region31: #{tpu_custom_call.1} parent=27 // pred_region
          %210 = dma.done %s202, 4096
        $region32: #{tpu_custom_call.1} parent=27 // pred_fallthru
          _
        %s211 = sand.u32 %s74, 1
        %s212 = scalar_lea.sflag [#allocation6], %s211
        %s213 = sand.u32 %s74, 1
        %s214 = smul.addr %s213, 256
        %s215 = scalar_lea.vmem [#allocation5], %s214
        // Predicated region
        $region33: #{tpu_custom_call.1} parent=27 // pred_check
          %p216 = pneg %p87
        $region34: #{tpu_custom_call.1} parent=27 // pred_check_branch
          %218 = sbr.rel (%p216) target = $region36
        $region35: #{tpu_custom_call.1} parent=27 // pred_region
          %220 = dma.done %s212, 4096
        $region36: #{tpu_custom_call.1} parent=27 // pred_fallthru
          _
        %s221 = sand.u32 %s44, 1
        %s222 = scalar_lea.sflag [#allocation3], %s221
        %s223 = sand.u32 %s44, 1
        %s224 = smul.addr %s223, 256
        %s225 = scalar_lea.vmem [#allocation2], %s224
        %p226 = pneg %p57
        %p227 = pneg %p54
        %s228 = sand.u32 %s74, 1
        %s229 = scalar_lea.sflag [#allocation6], %s228
        %s230 = sand.u32 %s74, 1
        %s231 = smul.addr %s230, 256
        %s232 = scalar_lea.vmem [#allocation5], %s231
        %p233 = pneg %p87
        %p234 = pneg %p84
        %p235 = pneg %p113
        %p236 = pneg %p110
        %s237 = smul.u32 %s24, 3
        %s238 = sadd.s32 %s237, %s25
        %s239 = smul.u32 32, %s238
        %s240 = ssub.s32 75, %s239
        %p241 = scmp.lt.s32.totalorder %s240, 32
        %s242 = scalar_select %p241, %s240, 32
        %s243 = smul.u32 8, %s242
        %s244 = smul.u32 %s24, 3
        %s245 = sadd.s32 %s244, %s25
        %s246 = smul.u32 32, %s245
        %s247 = ssub.s32 75, %s246
        %p248 = scmp.lt.s32.totalorder %s247, 32
        %s249 = scalar_select %p248, %s247, 32
        %s250 = smul.u32 8, %s249
        %p251 = scmp.eq.s32.totalorder %s25, 0
        // Predicated region
        $region37: #{tpu_custom_call.1} parent=27 // pred_check
          %p252 = pneg %p251
        $region38: #{tpu_custom_call.1} parent=27 // pred_check_branch
          %254 = sbr.rel (%p252) target = $region40
        $region39: #{tpu_custom_call.1} parent=27 // pred_region
          %255 = vst [vmem:[#allocation7] sm:$0xff] 0.0
        $region40: #{tpu_custom_call.1} parent=27 // pred_fallthru
          _
        %v256 = vld [vmem:[%s205] sm:$0xff]
        %v257 = vld [vmem:[%s205 + $0x8] sm:$0xff]
        %v258 = vld [vmem:[%s205 + $0x10] sm:$0xff]
        %v259 = vld [vmem:[%s205 + $0x18] sm:$0xff]
        %v260 = vld [vmem:[%s205 + $0x20] sm:$0xff]
        %v261 = vld [vmem:[%s205 + $0x28] sm:$0xff]
        %v262 = vld [vmem:[%s205 + $0x30] sm:$0xff]
        %v263 = vld [vmem:[%s205 + $0x38] sm:$0xff]
        %v264 = vld [vmem:[%s205 + $0x40] sm:$0xff]
        %v265 = vld [vmem:[%s205 + $0x48] sm:$0xff]
        %v266 = vld [vmem:[%s205 + $0x50] sm:$0xff]
        %v267 = vld [vmem:[%s205 + $0x58] sm:$0xff]
        %v268 = vld [vmem:[%s205 + $0x60] sm:$0xff]
        %v269 = vld [vmem:[%s205 + $0x68] sm:$0xff]
        %v270 = vld [vmem:[%s205 + $0x70] sm:$0xff]
        %v271 = vld [vmem:[%s205 + $0x78] sm:$0xff]
        %v272 = vld [vmem:[%s205 + $0x80] sm:$0xff]
        %v273 = vld [vmem:[%s205 + $0x88] sm:$0xff]
        %v274 = vld [vmem:[%s205 + $0x90] sm:$0xff]
        %v275 = vld [vmem:[%s205 + $0x98] sm:$0xff]
        %v276 = vld [vmem:[%s205 + $0xa0] sm:$0xff]
        %v277 = vld [vmem:[%s205 + $0xa8] sm:$0xff]
        %v278 = vld [vmem:[%s205 + $0xb0] sm:$0xff]
        %v279 = vld [vmem:[%s205 + $0xb8] sm:$0xff]
        %v280 = vld [vmem:[%s205 + $0xc0] sm:$0xff]
        %v281 = vld [vmem:[%s205 + $0xc8] sm:$0xff]
        %v282 = vld [vmem:[%s205 + $0xd0] sm:$0xff]
        %v283 = vld [vmem:[%s205 + $0xd8] sm:$0xff]
        %v284 = vld [vmem:[%s205 + $0xe0] sm:$0xff]
        %v285 = vld [vmem:[%s205 + $0xe8] sm:$0xff]
        %v286 = vld [vmem:[%s205 + $0xf0] sm:$0xff]
        %v287 = vld [vmem:[%s205 + $0xf8] sm:$0xff]
        %v288 = vld [vmem:[%s215] sm:$0xff]
        %v289 = vld [vmem:[%s215 + $0x8] sm:$0xff]
        %v290 = vld [vmem:[%s215 + $0x10] sm:$0xff]
        %v291 = vld [vmem:[%s215 + $0x18] sm:$0xff]
        %v292 = vld [vmem:[%s215 + $0x20] sm:$0xff]
        %v293 = vld [vmem:[%s215 + $0x28] sm:$0xff]
        %v294 = vld [vmem:[%s215 + $0x30] sm:$0xff]
        %v295 = vld [vmem:[%s215 + $0x38] sm:$0xff]
        %v296 = vld [vmem:[%s215 + $0x40] sm:$0xff]
        %v297 = vld [vmem:[%s215 + $0x48] sm:$0xff]
        %v298 = vld [vmem:[%s215 + $0x50] sm:$0xff]
        %v299 = vld [vmem:[%s215 + $0x58] sm:$0xff]
        %v300 = vld [vmem:[%s215 + $0x60] sm:$0xff]
        %v301 = vld [vmem:[%s215 + $0x68] sm:$0xff]
        %v302 = vld [vmem:[%s215 + $0x70] sm:$0xff]
        %v303 = vld [vmem:[%s215 + $0x78] sm:$0xff]
        %v304 = vld [vmem:[%s215 + $0x80] sm:$0xff]
        %v305 = vld [vmem:[%s215 + $0x88] sm:$0xff]
        %v306 = vld [vmem:[%s215 + $0x90] sm:$0xff]
        %v307 = vld [vmem:[%s215 + $0x98] sm:$0xff]
        %v308 = vld [vmem:[%s215 + $0xa0] sm:$0xff]
        %v309 = vld [vmem:[%s215 + $0xa8] sm:$0xff]
        %v310 = vld [vmem:[%s215 + $0xb0] sm:$0xff]
        %v311 = vld [vmem:[%s215 + $0xb8] sm:$0xff]
        %v312 = vld [vmem:[%s215 + $0xc0] sm:$0xff]
        %v313 = vld [vmem:[%s215 + $0xc8] sm:$0xff]
        %v314 = vld [vmem:[%s215 + $0xd0] sm:$0xff]
        %v315 = vld [vmem:[%s215 + $0xd8] sm:$0xff]
        %v316 = vld [vmem:[%s215 + $0xe0] sm:$0xff]
        %v317 = vld [vmem:[%s215 + $0xe8] sm:$0xff]
        %v318 = vld [vmem:[%s215 + $0xf0] sm:$0xff]
        %v319 = vld [vmem:[%s215 + $0xf8] sm:$0xff]
        %v320 = vsub.f32 %v256, %v288
        %v321 = vsub.f32 %v257, %v289
        %v322 = vsub.f32 %v258, %v290
        %v323 = vsub.f32 %v259, %v291
        %v324 = vsub.f32 %v260, %v292
        %v325 = vsub.f32 %v261, %v293
        %v326 = vsub.f32 %v262, %v294
        %v327 = vsub.f32 %v263, %v295
        %v328 = vsub.f32 %v264, %v296
        %v329 = vsub.f32 %v265, %v297
        %v330 = vsub.f32 %v266, %v298
        %v331 = vsub.f32 %v267, %v299
        %v332 = vsub.f32 %v268, %v300
        %v333 = vsub.f32 %v269, %v301
        %v334 = vsub.f32 %v270, %v302
        %v335 = vsub.f32 %v271, %v303
        %v336 = vsub.f32 %v272, %v304
        %v337 = vsub.f32 %v273, %v305
        %v338 = vsub.f32 %v274, %v306
        %v339 = vsub.f32 %v275, %v307
        %v340 = vsub.f32 %v276, %v308
        %v341 = vsub.f32 %v277, %v309
        %v342 = vsub.f32 %v278, %v310
        %v343 = vsub.f32 %v279, %v311
        %v344 = vsub.f32 %v280, %v312
        %v345 = vsub.f32 %v281, %v313
        %v346 = vsub.f32 %v282, %v314
        %v347 = vsub.f32 %v283, %v315
        %v348 = vsub.f32 %v284, %v316
        %v349 = vsub.f32 %v285, %v317
        %v350 = vsub.f32 %v286, %v318
        %v351 = vsub.f32 %v287, %v319
        %v352 = vmul.f32 %v320, %v320
        %v353 = vmul.f32 %v321, %v321
        %v354 = vmul.f32 %v322, %v322
        %v355 = vmul.f32 %v323, %v323
        %v356 = vmul.f32 %v324, %v324
        %v357 = vmul.f32 %v325, %v325
        %v358 = vmul.f32 %v326, %v326
        %v359 = vmul.f32 %v327, %v327
        %v360 = vmul.f32 %v328, %v328
        %v361 = vmul.f32 %v329, %v329
        %v362 = vmul.f32 %v330, %v330
        %v363 = vmul.f32 %v331, %v331
        %v364 = vmul.f32 %v332, %v332
        %v365 = vmul.f32 %v333, %v333
        %v366 = vmul.f32 %v334, %v334
        %v367 = vmul.f32 %v335, %v335
        %v368 = vmul.f32 %v336, %v336
        %v369 = vmul.f32 %v337, %v337
        %v370 = vmul.f32 %v338, %v338
        %v371 = vmul.f32 %v339, %v339
        %v372 = vmul.f32 %v340, %v340
        %v373 = vmul.f32 %v341, %v341
        %v374 = vmul.f32 %v342, %v342
        %v375 = vmul.f32 %v343, %v343
        %v376 = vmul.f32 %v344, %v344
        %v377 = vmul.f32 %v345, %v345
        %v378 = vmul.f32 %v346, %v346
        %v379 = vmul.f32 %v347, %v347
        %v380 = vmul.f32 %v348, %v348
        %v381 = vmul.f32 %v349, %v349
        %v382 = vmul.f32 %v350, %v350
        %v383 = vmul.f32 %v351, %v351
        %s384 = smul.u32 %s24, 3
        %s385 = sadd.s32 %s384, %s25
        %p386 = scmp.lt.s32.totalorder %s385, 2
        // Predicated region
        $region41: #{tpu_custom_call.1} parent=27 // pred_check
          %p387 = pneg %p386
        $region42: #{tpu_custom_call.1} parent=27 // pred_check_branch
          %389 = sbr.rel (%p387) target = $region44
        $region43: #{tpu_custom_call.1} parent=27 // pred_region
          %v390 = vld [vmem:[#allocation7] sm:$0xff]
          %v391 = vadd.f32 %v352, %v353
          %v392 = vadd.f32 %v391, %v354
          %v393 = vadd.f32 %v392, %v355
          %v394 = vadd.f32 %v393, %v356
          %v395 = vadd.f32 %v394, %v357
          %v396 = vadd.f32 %v395, %v358
          %v397 = vadd.f32 %v396, %v359
          %v398 = vadd.f32 %v397, %v360
          %v399 = vadd.f32 %v398, %v361
          %v400 = vadd.f32 %v399, %v362
          %v401 = vadd.f32 %v400, %v363
          %v402 = vadd.f32 %v401, %v364
          %v403 = vadd.f32 %v402, %v365
          %v404 = vadd.f32 %v403, %v366
          %v405 = vadd.f32 %v404, %v367
          %v406 = vadd.f32 %v405, %v368
          %v407 = vadd.f32 %v406, %v369
          %v408 = vadd.f32 %v407, %v370
          %v409 = vadd.f32 %v408, %v371
          %v410 = vadd.f32 %v409, %v372
          %v411 = vadd.f32 %v410, %v373
          %v412 = vadd.f32 %v411, %v374
          %v413 = vadd.f32 %v412, %v375
          %v414 = vadd.f32 %v413, %v376
          %v415 = vadd.f32 %v414, %v377
          %v416 = vadd.f32 %v415, %v378
          %v417 = vadd.f32 %v416, %v379
          %v418 = vadd.f32 %v417, %v380
          %v419 = vadd.f32 %v418, %v381
          %v420 = vadd.f32 %v419, %v382
          %v421 = vadd.f32 %v420, %v383
          %v422 = vadd.f32 %v390, %v421
          %423 = vst [vmem:[#allocation7] sm:$0xff] %v422
        $region44: #{tpu_custom_call.1} parent=27 // pred_fallthru
          _
        %p424 = scmp.ge.s32.totalorder %s385, 2
        // Predicated region
        $region45: #{tpu_custom_call.1} parent=27 // pred_check
          %p425 = pneg %p424
        $region46: #{tpu_custom_call.1} parent=27 // pred_check_branch
          %427 = sbr.rel (%p425) target = $region48
        $region47: #{tpu_custom_call.1} parent=27 // pred_region
          %s428 = smul.u32 %s385, 256
          %v429 = vlaneseq
          %v430 = vshrl.u32 %v429, 7
          %v431 = vadd.s32 %v430, 8
          %v432 = vadd.s32 %v430, 16
          %v433 = vadd.s32 %v430, 24
          %v434 = vadd.s32 %v430, 32
          %v435 = vadd.s32 %v430, 40
          %v436 = vadd.s32 %v430, 48
          %v437 = vadd.s32 %v430, 56
          %v438 = vadd.s32 %v430, 64
          %v439 = vadd.s32 %v430, 72
          %v440 = vadd.s32 %v430, 80
          %v441 = vadd.s32 %v430, 88
          %v442 = vadd.s32 %v430, 96
          %v443 = vadd.s32 %v430, 104
          %v444 = vadd.s32 %v430, 112
          %v445 = vadd.s32 %v430, 120
          %v446 = vadd.s32 %v430, 128
          %v447 = vadd.s32 %v430, 136
          %v448 = vadd.s32 %v430, 144
          %v449 = vadd.s32 %v430, 152
          %v450 = vadd.s32 %v430, 160
          %v451 = vadd.s32 %v430, 168
          %v452 = vadd.s32 %v430, 176
          %v453 = vadd.s32 %v430, 184
          %v454 = vadd.s32 %v430, 192
          %v455 = vadd.s32 %v430, 200
          %v456 = vadd.s32 %v430, 208
          %v457 = vadd.s32 %v430, 216
          %v458 = vadd.s32 %v430, 224
          %v459 = vadd.s32 %v430, 232
          %v460 = vadd.s32 %v430, 240
          %v461 = vadd.s32 %v430, 248
          %v462 = vstv %s428
          %v463 = vadd.s32 %v462, %v430
          %v464 = vadd.s32 %v462, %v431
          %v465 = vadd.s32 %v462, %v432
          %v466 = vadd.s32 %v462, %v433
          %v467 = vadd.s32 %v462, %v434
          %v468 = vadd.s32 %v462, %v435
          %v469 = vadd.s32 %v462, %v436
          %v470 = vadd.s32 %v462, %v437
          %v471 = vadd.s32 %v462, %v438
          %v472 = vadd.s32 %v462, %v439
          %v473 = vadd.s32 %v462, %v440
          %v474 = vadd.s32 %v462, %v441
          %v475 = vadd.s32 %v462, %v442
          %v476 = vadd.s32 %v462, %v443
          %v477 = vadd.s32 %v462, %v444
          %v478 = vadd.s32 %v462, %v445
          %v479 = vadd.s32 %v462, %v446
          %v480 = vadd.s32 %v462, %v447
          %v481 = vadd.s32 %v462, %v448
          %v482 = vadd.s32 %v462, %v449
          %v483 = vadd.s32 %v462, %v450
          %v484 = vadd.s32 %v462, %v451
          %v485 = vadd.s32 %v462, %v452
          %v486 = vadd.s32 %v462, %v453
          %v487 = vadd.s32 %v462, %v454
          %v488 = vadd.s32 %v462, %v455
          %v489 = vadd.s32 %v462, %v456
          %v490 = vadd.s32 %v462, %v457
          %v491 = vadd.s32 %v462, %v458
          %v492 = vadd.s32 %v462, %v459
          %v493 = vadd.s32 %v462, %v460
          %v494 = vadd.s32 %v462, %v461
          %vm495 = vcmp.lt.s32.totalorder %v463, 600
          %vm496 = vcmp.lt.s32.totalorder %v464, 600
          %vm497 = vcmp.lt.s32.totalorder %v465, 600
          %vm498 = vcmp.lt.s32.totalorder %v466, 600
          %vm499 = vcmp.lt.s32.totalorder %v467, 600
          %vm500 = vcmp.lt.s32.totalorder %v468, 600
          %vm501 = vcmp.lt.s32.totalorder %v469, 600
          %vm502 = vcmp.lt.s32.totalorder %v470, 600
          %vm503 = vcmp.lt.s32.totalorder %v471, 600
          %vm504 = vcmp.lt.s32.totalorder %v472, 600
          %vm505 = vcmp.lt.s32.totalorder %v473, 600
          %vm506 = vcmp.lt.s32.totalorder %v474, 600
          %vm507 = vcmp.lt.s32.totalorder %v475, 600
          %vm508 = vcmp.lt.s32.totalorder %v476, 600
          %vm509 = vcmp.lt.s32.totalorder %v477, 600
          %vm510 = vcmp.lt.s32.totalorder %v478, 600
          %vm511 = vcmp.lt.s32.totalorder %v479, 600
          %vm512 = vcmp.lt.s32.totalorder %v480, 600
          %vm513 = vcmp.lt.s32.totalorder %v481, 600
          %vm514 = vcmp.lt.s32.totalorder %v482, 600
          %vm515 = vcmp.lt.s32.totalorder %v483, 600
          %vm516 = vcmp.lt.s32.totalorder %v484, 600
          %vm517 = vcmp.lt.s32.totalorder %v485, 600
          %vm518 = vcmp.lt.s32.totalorder %v486, 600
          %vm519 = vcmp.lt.s32.totalorder %v487, 600
          %vm520 = vcmp.lt.s32.totalorder %v488, 600
          %vm521 = vcmp.lt.s32.totalorder %v489, 600
          %vm522 = vcmp.lt.s32.totalorder %v490, 600
          %vm523 = vcmp.lt.s32.totalorder %v491, 600
          %vm524 = vcmp.lt.s32.totalorder %v492, 600
          %vm525 = vcmp.lt.s32.totalorder %v493, 600
          %vm526 = vcmp.lt.s32.totalorder %v494, 600
          %v527 = vsel %vm495, %v352, 0.0
          %v528 = vsel %vm496, %v353, 0.0
          %v529 = vsel %vm497, %v354, 0.0
          %v530 = vsel %vm498, %v355, 0.0
          %v531 = vsel %vm499, %v356, 0.0
          %v532 = vsel %vm500, %v357, 0.0
          %v533 = vsel %vm501, %v358, 0.0
          %v534 = vsel %vm502, %v359, 0.0
          %v535 = vsel %vm503, %v360, 0.0
          %v536 = vsel %vm504, %v361, 0.0
          %v537 = vsel %vm505, %v362, 0.0
          %v538 = vsel %vm506, %v363, 0.0
          %v539 = vsel %vm507, %v364, 0.0
          %v540 = vsel %vm508, %v365, 0.0
          %v541 = vsel %vm509, %v366, 0.0
          %v542 = vsel %vm510, %v367, 0.0
          %v543 = vsel %vm511, %v368, 0.0
          %v544 = vsel %vm512, %v369, 0.0
          %v545 = vsel %vm513, %v370, 0.0
          %v546 = vsel %vm514, %v371, 0.0
          %v547 = vsel %vm515, %v372, 0.0
          %v548 = vsel %vm516, %v373, 0.0
          %v549 = vsel %vm517, %v374, 0.0
          %v550 = vsel %vm518, %v375, 0.0
          %v551 = vsel %vm519, %v376, 0.0
          %v552 = vsel %vm520, %v377, 0.0
          %v553 = vsel %vm521, %v378, 0.0
          %v554 = vsel %vm522, %v379, 0.0
          %v555 = vsel %vm523, %v380, 0.0
          %v556 = vsel %vm524, %v381, 0.0
          %v557 = vsel %vm525, %v382, 0.0
          %v558 = vsel %vm526, %v383, 0.0
          %v559 = vld [vmem:[#allocation7] sm:$0xff]
          %v560 = vadd.f32 %v527, %v528
          %v561 = vadd.f32 %v560, %v529
          %v562 = vadd.f32 %v561, %v530
          %v563 = vadd.f32 %v562, %v531
          %v564 = vadd.f32 %v563, %v532
          %v565 = vadd.f32 %v564, %v533
          %v566 = vadd.f32 %v565, %v534
          %v567 = vadd.f32 %v566, %v535
          %v568 = vadd.f32 %v567, %v536
          %v569 = vadd.f32 %v568, %v537
          %v570 = vadd.f32 %v569, %v538
          %v571 = vadd.f32 %v570, %v539
          %v572 = vadd.f32 %v571, %v540
          %v573 = vadd.f32 %v572, %v541
          %v574 = vadd.f32 %v573, %v542
          %v575 = vadd.f32 %v574, %v543
          %v576 = vadd.f32 %v575, %v544
          %v577 = vadd.f32 %v576, %v545
          %v578 = vadd.f32 %v577, %v546
          %v579 = vadd.f32 %v578, %v547
          %v580 = vadd.f32 %v579, %v548
          %v581 = vadd.f32 %v580, %v549
          %v582 = vadd.f32 %v581, %v550
          %v583 = vadd.f32 %v582, %v551
          %v584 = vadd.f32 %v583, %v552
          %v585 = vadd.f32 %v584, %v553
          %v586 = vadd.f32 %v585, %v554
          %v587 = vadd.f32 %v586, %v555
          %v588 = vadd.f32 %v587, %v556
          %v589 = vadd.f32 %v588, %v557
          %v590 = vadd.f32 %v589, %v558
          %v591 = vadd.f32 %v559, %v590
          %592 = vst [vmem:[#allocation7] sm:$0xff] %v591
        $region48: #{tpu_custom_call.1} parent=27 // pred_fallthru
          _
        // Predicated region
        $region49: #{tpu_custom_call.1} parent=27 // pred_check
          %p593 = pneg %p110
        $region50: #{tpu_custom_call.1} parent=27 // pred_check_branch
          %595 = sbr.rel (%p593) target = $region52
        $region51: #{tpu_custom_call.1} parent=27 // pred_region
          %597 = vsyncadd [#allocation4], 0
          %s598 = smul.addr %s24, 8
          %s599 = scalar_lea.hbm %s2, %s598
          %s601 = sshll.u32 [#allocation7], 4
          %s602 = int_to_ptr.vmem [resolvable:$true] %s601
          %s603 = sshll.u32 %s599, 4
          %s604 = int_to_ptr.hbm [resolvable:$true] %s603
          %606 = dma.vmem_to_hbm [thread:$0]  %s602, 128, %s604, [#allocation4]
        $region52: #{tpu_custom_call.1} parent=27 // pred_fallthru
          _
        // Predicated region
        $region53: #{tpu_custom_call.1} parent=27 // pred_check
          %p607 = pneg %p110
        $region54: #{tpu_custom_call.1} parent=27 // pred_check_branch
          %609 = sbr.rel (%p607) target = $region56
        $region55: #{tpu_custom_call.1} parent=27 // pred_region
          %611 = dma.done [#allocation4], 128
        $region56: #{tpu_custom_call.1} parent=27 // pred_fallthru
          _
      $region28: #{tpu_custom_call.1} parent=5 // pred_fallthru
        _
      %p612 = scmp.le.s32.totalorder 2, %s15
      // Predicated region
      $region57: #{tpu_custom_call.1} parent=5 // pred_check
        %p613 = pneg %p612
      $region58: #{tpu_custom_call.1} parent=5 // pred_check_branch
        %615 = sbr.rel (%p613) target = $region60
      $region59: #{tpu_custom_call.1} parent=5 // pred_region
        %s616 = ssub.s32 %s15, 2
      $region60: #{tpu_custom_call.1} parent=5 // pred_fallthru
        _
    $region6: #{tpu_custom_call.1} parent=1 // loop_footer
      %s19 = sadd.s32 1, %s15
    $region7: #{tpu_custom_call.1} parent=1 // loop_footer_branch
      %14 = sbr.rel target = $region3
    $region8: #{tpu_custom_call.1} parent=1 // loop_exit
      _
    %617 = vsyncpa [#allocation3], 1
    %s618 = scalar_lea.sflag [#allocation3], 1
    %619 = vsyncpa %s618, 1
    %620 = vsyncpa [#allocation6], 1
    %s621 = scalar_lea.sflag [#allocation6], 1
    %622 = vsyncpa %s621, 1
    %623 = vsyncpa [#allocation4], 1
    %s624 = scalar_lea.sflag [#allocation4], 1
    %625 = vsyncpa %s624, 1

</llo_original>
